<compile_context>
chip_gen: v7x
topology: tpu7x:2x2x1
jax: 0.10.0
libtpu: 0.0.40
codegen_flags: <defaults>
</compile_context>

<pallas_src>
import functools

import jax
import jax.numpy as jnp
from jax.experimental import pallas as pl
from jax.experimental.pallas import tpu as pltpu


HIDDEN = 64
_LANE = 128


def _round_up(n, m):
    return (n + m - 1) // m * m


def _critic_kernel(x_ref,
                   w1_ref, b1_ref,
                   w2_ref, b2_ref,
                   w3_ref, b3_ref,
                   w4_ref, b4_ref,
                   w5_ref, b5_ref,
                   o_ref):
    """One batch tile of the fused critic MLP, in (features, batch) layout.

    x_ref : (input_dim, Bt)  matmul dtype (bf16 by default)
    wk_ref: (out_k, in_k)    matmul dtype  (PyTorch (out, in) layout)
    bk_ref: (out_k, 1)       f32 for k=1..4; b5 is a single f32 scalar in SMEM
    o_ref : (1, Bt)          f32, lane-dense output
    """
    mm_dtype = x_ref.dtype

    h = x_ref[...]                                          # (D_in, Bt)
    # Four Linear(·,64)+Tanh layers; MXU matmul with f32 accumulation,
    # bias add + tanh in f32, then cast back for the next MXU pass.
    for w_ref, b_ref in ((w1_ref, b1_ref), (w2_ref, b2_ref),
                         (w3_ref, b3_ref), (w4_ref, b4_ref)):
        z = jnp.dot(w_ref[...], h, preferred_element_type=jnp.float32)
        h = jnp.tanh(z + b_ref[...]).astype(mm_dtype)       # (64, Bt)

    # Head: Linear(64, 1), lane-dense (1, Bt) output in f32.
    out = jnp.dot(w5_ref[...], h, preferred_element_type=jnp.float32)
    o_ref[...] = out + b5_ref[0]                            # (1, Bt), f32


@functools.partial(jax.jit, static_argnames=("block_batch", "matmul_dtype"))
def critic_forward(x, params, *, block_batch=1024, matmul_dtype=jnp.bfloat16):
    """Runs the fused critic MLP. x: (B, input_dim) f32 -> (B, 1) f32."""
    batch, input_dim = x.shape

    # Batch tile: multiple of 128 lanes; shrink for small batches, bound for
    # VMEM safety everywhere (v7x: 64 MiB physical / 32 MiB default scoped).
    bt = block_batch if batch >= block_batch else _round_up(max(batch, 1), _LANE)
    b_pad = _round_up(batch, bt)
    grid = (b_pad // bt,)

    # (features, batch) layout, batch padded to the tile, bf16 for the MXU.
    xT = jnp.pad(x.T.astype(matmul_dtype), ((0, 0), (0, b_pad - batch)))

    (w1, b1), (w2, b2), (w3, b3), (w4, b4), (w5, b5) = params
    wcast = lambda w: w.astype(matmul_dtype)
    col = lambda b: b.reshape(-1, 1).astype(jnp.float32)
    flat = (wcast(w1), col(b1), wcast(w2), col(b2), wcast(w3), col(b3),
            wcast(w4), col(b4), wcast(w5), b5.reshape(1).astype(jnp.float32))

    resident = lambda shape: pl.BlockSpec(shape, lambda i: (0, 0))
    in_specs = [
        pl.BlockSpec((input_dim, bt), lambda i: (0, i)),      # x batch tile
        resident((HIDDEN, input_dim)), resident((HIDDEN, 1)),
        resident((HIDDEN, HIDDEN)), resident((HIDDEN, 1)),
        resident((HIDDEN, HIDDEN)), resident((HIDDEN, 1)),
        resident((HIDDEN, HIDDEN)), resident((HIDDEN, 1)),
        resident((1, HIDDEN)),
        pl.BlockSpec(memory_space=pltpu.MemorySpace.SMEM),    # b5 scalar
    ]
    out_specs = pl.BlockSpec((1, bt), lambda i: (0, i))       # lane-dense

    elem = jnp.dtype(matmul_dtype).itemsize
    weight_bytes = sum(int(a.size) * a.dtype.itemsize for a in flat)
    cost = pl.CostEstimate(
        flops=2 * batch * (input_dim * HIDDEN + 3 * HIDDEN * HIDDEN + HIDDEN),
        transcendentals=4 * HIDDEN * batch,
        bytes_accessed=batch * input_dim * elem + batch * 4 + weight_bytes,
    )

    outT = pl.pallas_call(
        _critic_kernel,
        out_shape=jax.ShapeDtypeStruct((1, b_pad), jnp.float32),
        grid=grid,
        in_specs=in_specs,
        out_specs=out_specs,
        compiler_params=pltpu.CompilerParams(
            dimension_semantics=("parallel",),
            vmem_limit_bytes=32 * 1024 * 1024,
        ),
        cost_estimate=cost,
    )(xT, *flat)

    return outT[0, :batch].reshape(batch, 1)


def make_critic_params(input_dim, key):
    """Mirrors CriticNetwork.__init__: weights in PyTorch (out, in) layout,
    orthogonal init (std sqrt(2) for hidden layers, 1.0 for the head), zero bias."""
    keys = jax.random.split(key, 5)
    sqrt2 = 2.0 ** 0.5
    dims = [(HIDDEN, input_dim), (HIDDEN, HIDDEN), (HIDDEN, HIDDEN),
            (HIDDEN, HIDDEN), (1, HIDDEN)]
    gains = [sqrt2, sqrt2, sqrt2, sqrt2, 1.0]
    params = []
    for k, shape, g in zip(keys, dims, gains):
        w = jax.nn.initializers.orthogonal(scale=g)(k, shape, jnp.float32)
        b = jnp.zeros((shape[0],), jnp.float32)
        params.append((w, b))
    return params


def critic_reference_f32(x, params):
    """Pure-f32 JAX reference of the PyTorch forward pass."""
    h = x
    for i, (w, b) in enumerate(params):
        h = h @ w.T + b
        if i < len(params) - 1:
            h = jnp.tanh(h)
    return h


def critic_reference_matched(x, params, matmul_dtype=jnp.bfloat16):
    """Reference with the kernel's exact numerics (bf16 operands, f32 accum)."""
    hT = x.T.astype(matmul_dtype)
    n = len(params)
    for i, (w, b) in enumerate(params):
        z = jnp.dot(w.astype(matmul_dtype), hT,
                    preferred_element_type=jnp.float32) + b.reshape(-1, 1)
        hT = jnp.tanh(z).astype(matmul_dtype) if i < n - 1 else z
    return hT.T


if __name__ == "__main__":
    key = jax.random.PRNGKey(0)
    k_param, k_x1, k_x2 = jax.random.split(key, 3)

    input_dim = 8
    params = make_critic_params(input_dim, k_param)

    # Small batch (pads to one 128-lane tile, grid=(1,)).
    x_small = jax.random.normal(k_x1, (4, input_dim), jnp.float32)
    out_small = jax.block_until_ready(critic_forward(x_small, params))
    assert out_small.shape == (4, 1), out_small.shape

    # Larger, non-tile-multiple batch (exercises padding + multi-step grid).
    x_big = jax.random.normal(k_x2, (300, input_dim), jnp.float32)
    out_big = jax.block_until_ready(
        critic_forward(x_big, params, block_batch=128))
    assert out_big.shape == (300, 1), out_big.shape

    for x, out in ((x_small, out_small), (x_big, out_big)):
        ref_match = critic_reference_matched(x, params)
        ref_f32 = critic_reference_f32(x, params)
        assert jnp.allclose(out, ref_match, atol=2e-3, rtol=2e-3), (
            float(jnp.max(jnp.abs(out - ref_match))))
        assert jnp.allclose(out, ref_f32, atol=1e-1, rtol=1e-1), (
            float(jnp.max(jnp.abs(out - ref_f32))))

    print("KERNEL_OK")
</pallas_src>

<mosaic_0001>
module attributes {stable_mosaic.version = 11 : i64} {
  func.func @_critic_kernel(%arg0: i32, %arg1: memref<8x128xbf16, #tpu.memory_space<vmem>>, %arg2: memref<64x8xbf16, #tpu.memory_space<vmem>>, %arg3: memref<64x1xf32, #tpu.memory_space<vmem>>, %arg4: memref<64x64xbf16, #tpu.memory_space<vmem>>, %arg5: memref<64x1xf32, #tpu.memory_space<vmem>>, %arg6: memref<64x64xbf16, #tpu.memory_space<vmem>>, %arg7: memref<64x1xf32, #tpu.memory_space<vmem>>, %arg8: memref<64x64xbf16, #tpu.memory_space<vmem>>, %arg9: memref<64x1xf32, #tpu.memory_space<vmem>>, %arg10: memref<1x64xbf16, #tpu.memory_space<vmem>>, %arg11: memref<1xf32, #tpu.memory_space<smem>>, %arg12: memref<1x128xf32, #tpu.memory_space<vmem>>) attributes {dimension_semantics = [#tpu.dimension_semantics<parallel>], iteration_bounds = array<i64: 1>, scalar_prefetch = 0 : i64, scratch_operands = 0 : i64, tpu.core_type = #tpu.core_type<tc>, window_params = [{transform_indices = @transform_0, window_bounds = array<i64: 8, 128>}, {pipeline_mode = #tpu.pipeline_mode<synchronous>, transform_indices = @transform_1, window_bounds = array<i64: 64, 8>}, {pipeline_mode = #tpu.pipeline_mode<synchronous>, transform_indices = @transform_2, window_bounds = array<i64: 64, 1>}, {pipeline_mode = #tpu.pipeline_mode<synchronous>, transform_indices = @transform_3, window_bounds = array<i64: 64, 64>}, {pipeline_mode = #tpu.pipeline_mode<synchronous>, transform_indices = @transform_4, window_bounds = array<i64: 64, 1>}, {pipeline_mode = #tpu.pipeline_mode<synchronous>, transform_indices = @transform_5, window_bounds = array<i64: 64, 64>}, {pipeline_mode = #tpu.pipeline_mode<synchronous>, transform_indices = @transform_6, window_bounds = array<i64: 64, 1>}, {pipeline_mode = #tpu.pipeline_mode<synchronous>, transform_indices = @transform_7, window_bounds = array<i64: 64, 64>}, {pipeline_mode = #tpu.pipeline_mode<synchronous>, transform_indices = @transform_8, window_bounds = array<i64: 64, 1>}, {pipeline_mode = #tpu.pipeline_mode<synchronous>, transform_indices = @transform_9, window_bounds = array<i64: 1, 64>}, {transform_indices = @transform_10, window_bounds = array<i64: 1>}, {transform_indices = @transform_11, window_bounds = array<i64: 1, 128>}]} {
    %c0 = arith.constant 0 : index
    %c0_0 = arith.constant 0 : index
    %0 = vector.load %arg1[%c0, %c0_0] : memref<8x128xbf16, #tpu.memory_space<vmem>>, vector<8x128xbf16>
    %c0_1 = arith.constant 0 : index
    %c0_2 = arith.constant 0 : index
    %1 = vector.load %arg2[%c0_1, %c0_2] : memref<64x8xbf16, #tpu.memory_space<vmem>>, vector<64x8xbf16>
    %cst = arith.constant dense<0.000000e+00> : vector<64x128xf32>
    %2 = tpu.matmul %1, %0, %cst {dimension_numbers = #tpu.dot_dimension_numbers<[1], [0], [0], [1], [0, 0, 1, 1], [], []>} : vector<64x8xbf16>, vector<8x128xbf16>, vector<64x128xf32> -> vector<64x128xf32>
    %c0_3 = arith.constant 0 : index
    %c0_4 = arith.constant 0 : index
    %3 = vector.load %arg3[%c0_3, %c0_4] : memref<64x1xf32, #tpu.memory_space<vmem>>, vector<64x1xf32>
    %4 = vector.broadcast %3 : vector<64x1xf32> to vector<64x128xf32>
    %5 = arith.addf %2, %4 : vector<64x128xf32>
    %6 = math.tanh %5 : vector<64x128xf32>
    %7 = arith.truncf %6 : vector<64x128xf32> to vector<64x128xbf16>
    %c0_5 = arith.constant 0 : index
    %c0_6 = arith.constant 0 : index
    %8 = vector.load %arg4[%c0_5, %c0_6] : memref<64x64xbf16, #tpu.memory_space<vmem>>, vector<64x64xbf16>
    %cst_7 = arith.constant dense<0.000000e+00> : vector<64x128xf32>
    %9 = tpu.matmul %8, %7, %cst_7 {dimension_numbers = #tpu.dot_dimension_numbers<[1], [0], [0], [1], [0, 0, 1, 1], [], []>} : vector<64x64xbf16>, vector<64x128xbf16>, vector<64x128xf32> -> vector<64x128xf32>
    %c0_8 = arith.constant 0 : index
    %c0_9 = arith.constant 0 : index
    %10 = vector.load %arg5[%c0_8, %c0_9] : memref<64x1xf32, #tpu.memory_space<vmem>>, vector<64x1xf32>
    %11 = vector.broadcast %10 : vector<64x1xf32> to vector<64x128xf32>
    %12 = arith.addf %9, %11 : vector<64x128xf32>
    %13 = math.tanh %12 : vector<64x128xf32>
    %14 = arith.truncf %13 : vector<64x128xf32> to vector<64x128xbf16>
    %c0_10 = arith.constant 0 : index
    %c0_11 = arith.constant 0 : index
    %15 = vector.load %arg6[%c0_10, %c0_11] : memref<64x64xbf16, #tpu.memory_space<vmem>>, vector<64x64xbf16>
    %cst_12 = arith.constant dense<0.000000e+00> : vector<64x128xf32>
    %16 = tpu.matmul %15, %14, %cst_12 {dimension_numbers = #tpu.dot_dimension_numbers<[1], [0], [0], [1], [0, 0, 1, 1], [], []>} : vector<64x64xbf16>, vector<64x128xbf16>, vector<64x128xf32> -> vector<64x128xf32>
    %c0_13 = arith.constant 0 : index
    %c0_14 = arith.constant 0 : index
    %17 = vector.load %arg7[%c0_13, %c0_14] : memref<64x1xf32, #tpu.memory_space<vmem>>, vector<64x1xf32>
    %18 = vector.broadcast %17 : vector<64x1xf32> to vector<64x128xf32>
    %19 = arith.addf %16, %18 : vector<64x128xf32>
    %20 = math.tanh %19 : vector<64x128xf32>
    %21 = arith.truncf %20 : vector<64x128xf32> to vector<64x128xbf16>
    %c0_15 = arith.constant 0 : index
    %c0_16 = arith.constant 0 : index
    %22 = vector.load %arg8[%c0_15, %c0_16] : memref<64x64xbf16, #tpu.memory_space<vmem>>, vector<64x64xbf16>
    %cst_17 = arith.constant dense<0.000000e+00> : vector<64x128xf32>
    %23 = tpu.matmul %22, %21, %cst_17 {dimension_numbers = #tpu.dot_dimension_numbers<[1], [0], [0], [1], [0, 0, 1, 1], [], []>} : vector<64x64xbf16>, vector<64x128xbf16>, vector<64x128xf32> -> vector<64x128xf32>
    %c0_18 = arith.constant 0 : index
    %c0_19 = arith.constant 0 : index
    %24 = vector.load %arg9[%c0_18, %c0_19] : memref<64x1xf32, #tpu.memory_space<vmem>>, vector<64x1xf32>
    %25 = vector.broadcast %24 : vector<64x1xf32> to vector<64x128xf32>
    %26 = arith.addf %23, %25 : vector<64x128xf32>
    %27 = math.tanh %26 : vector<64x128xf32>
    %28 = arith.truncf %27 : vector<64x128xf32> to vector<64x128xbf16>
    %c0_20 = arith.constant 0 : index
    %c0_21 = arith.constant 0 : index
    %29 = vector.load %arg10[%c0_20, %c0_21] : memref<1x64xbf16, #tpu.memory_space<vmem>>, vector<1x64xbf16>
    %cst_22 = arith.constant dense<0.000000e+00> : vector<1x128xf32>
    %30 = tpu.matmul %29, %28, %cst_22 {dimension_numbers = #tpu.dot_dimension_numbers<[1], [0], [0], [1], [0, 0, 1, 1], [], []>} : vector<1x64xbf16>, vector<64x128xbf16>, vector<1x128xf32> -> vector<1x128xf32>
    %c0_23 = arith.constant 0 : index
    %31 = memref.load %arg11[%c0_23] : memref<1xf32, #tpu.memory_space<smem>>
    %32 = vector.broadcast %31 : f32 to vector<1x128xf32>
    %33 = arith.addf %30, %32 : vector<1x128xf32>
    %c0_24 = arith.constant 0 : index
    %c0_25 = arith.constant 0 : index
    %34 = vector.load %arg12[%c0_24, %c0_25] : memref<1x128xf32, #tpu.memory_space<vmem>>, vector<1x128xf32>
    tpu.vector_store %arg12[%c0_24, %c0_25], %33 {strides = array<i32>} : memref<1x128xf32, #tpu.memory_space<vmem>>, vector<1x128xf32>,
    return
  }
  func.func @transform_0(%arg0: i32) -> (i32, i32) {
    %c0_i32 = arith.constant 0 : i32
    %c0_i32_0 = arith.constant 0 : i32
    return %c0_i32, %arg0 : i32, i32
  }
  func.func @transform_1(%arg0: i32) -> (i32, i32) {
    %c0_i32 = arith.constant 0 : i32
    %c0_i32_0 = arith.constant 0 : i32
    %c0_i32_1 = arith.constant 0 : i32
    return %c0_i32, %c0_i32_0 : i32, i32
  }
  func.func @transform_2(%arg0: i32) -> (i32, i32) {
    %c0_i32 = arith.constant 0 : i32
    %c0_i32_0 = arith.constant 0 : i32
    %c0_i32_1 = arith.constant 0 : i32
    return %c0_i32, %c0_i32_0 : i32, i32
  }
  func.func @transform_3(%arg0: i32) -> (i32, i32) {
    %c0_i32 = arith.constant 0 : i32
    %c0_i32_0 = arith.constant 0 : i32
    %c0_i32_1 = arith.constant 0 : i32
    return %c0_i32, %c0_i32_0 : i32, i32
  }
  func.func @transform_4(%arg0: i32) -> (i32, i32) {
    %c0_i32 = arith.constant 0 : i32
    %c0_i32_0 = arith.constant 0 : i32
    %c0_i32_1 = arith.constant 0 : i32
    return %c0_i32, %c0_i32_0 : i32, i32
  }
  func.func @transform_5(%arg0: i32) -> (i32, i32) {
    %c0_i32 = arith.constant 0 : i32
    %c0_i32_0 = arith.constant 0 : i32
    %c0_i32_1 = arith.constant 0 : i32
    return %c0_i32, %c0_i32_0 : i32, i32
  }
  func.func @transform_6(%arg0: i32) -> (i32, i32) {
    %c0_i32 = arith.constant 0 : i32
    %c0_i32_0 = arith.constant 0 : i32
    %c0_i32_1 = arith.constant 0 : i32
    return %c0_i32, %c0_i32_0 : i32, i32
  }
  func.func @transform_7(%arg0: i32) -> (i32, i32) {
    %c0_i32 = arith.constant 0 : i32
    %c0_i32_0 = arith.constant 0 : i32
    %c0_i32_1 = arith.constant 0 : i32
    return %c0_i32, %c0_i32_0 : i32, i32
  }
  func.func @transform_8(%arg0: i32) -> (i32, i32) {
    %c0_i32 = arith.constant 0 : i32
    %c0_i32_0 = arith.constant 0 : i32
    %c0_i32_1 = arith.constant 0 : i32
    return %c0_i32, %c0_i32_0 : i32, i32
  }
  func.func @transform_9(%arg0: i32) -> (i32, i32) {
    %c0_i32 = arith.constant 0 : i32
    %c0_i32_0 = arith.constant 0 : i32
    %c0_i32_1 = arith.constant 0 : i32
    return %c0_i32, %c0_i32_0 : i32, i32
  }
  func.func @transform_10(%arg0: i32) -> i32 {
    %c0_i32 = arith.constant 0 : i32
    %c0_i32_0 = arith.constant 0 : i32
    return %c0_i32 : i32
  }
  func.func @transform_11(%arg0: i32) -> (i32, i32) {
    %c0_i32 = arith.constant 0 : i32
    %c0_i32_0 = arith.constant 0 : i32
    return %c0_i32, %arg0 : i32, i32
  }
}

</mosaic_0001>

<llo_original>
// kernel: critic_forward.1
$region0: #{critic_forward.1}
  #allocation0 [shape = 'u32[]', space=smem, size = 0x4, offset = 0x4, fixed_abs, tag = 'smem constant byte address 0x4 - core index']
  #allocation1 [shape = 'u32[144,128]{1,0:T(1,128)}', space=vmem, size = 0x12000, scoped, tag = 'internal scratch']
  #allocation2 [shape = 'f32[1]{0:T(128)S(6)}', space=smem, size = 0x200, scoped, tag = 'scoped memory for critic_forward.1']
  %s0 = inlined_call_operand.vmem [shape: bf16[8,128], index: 0, kind: input, shape index: {}]
  %s1 = inlined_call_operand.vmem [shape: bf16[64,8], index: 1, kind: input, shape index: {}]
  %s2 = inlined_call_operand.vmem [shape: f32[64,1], index: 2, kind: input, shape index: {}]
  %s3 = inlined_call_operand.vmem [shape: bf16[64,64], index: 3, kind: input, shape index: {}]
  %s4 = inlined_call_operand.vmem [shape: f32[64,1], index: 4, kind: input, shape index: {}]
  %s5 = inlined_call_operand.vmem [shape: bf16[64,64], index: 5, kind: input, shape index: {}]
  %s6 = inlined_call_operand.vmem [shape: f32[64,1], index: 6, kind: input, shape index: {}]
  %s7 = inlined_call_operand.vmem [shape: bf16[64,64], index: 7, kind: input, shape index: {}]
  %s8 = inlined_call_operand.vmem [shape: f32[64,1], index: 8, kind: input, shape index: {}]
  %s9 = inlined_call_operand.vmem [shape: bf16[1,64], index: 9, kind: input, shape index: {}]
  %s10 = inlined_call_operand.<no memory space> [shape: f32[1], index: 10, kind: input, shape index: {}]
  %s11 = inlined_call_operand.vmem [shape: f32[1,128], index: 11, kind: output, shape index: {}]
  %s12 = sld [smem:[#allocation0]]
  $region54: #{critic_forward.1} parent=0
    _
  %s14 = ssub.s32 1, %s12
  %s15 = scalar_select 0, %s14, %s12
  %16 = sst [smem:[#allocation2]] %s10
  // Predicated region
  $region2: #{critic_forward.1} parent=0 // pred_check
    _
  $region3: #{critic_forward.1} parent=0 // pred_check_branch
    %18 = sbr.rel (0) target = $region5
  $region4: #{critic_forward.1} parent=0 // pred_region
    _
  $region5: #{critic_forward.1} parent=0 // pred_fallthru
    _
  // Predicated region
  $region6: #{critic_forward.1} parent=0 // pred_check
    _
  $region7: #{critic_forward.1} parent=0 // pred_check_branch
    %20 = sbr.rel (0) target = $region9
  $region8: #{critic_forward.1} parent=0 // pred_region
    _
  $region9: #{critic_forward.1} parent=0 // pred_fallthru
    _
  // Predicated region
  $region10: #{critic_forward.1} parent=0 // pred_check
    _
  $region11: #{critic_forward.1} parent=0 // pred_check_branch
    %22 = sbr.rel (0) target = $region13
  $region12: #{critic_forward.1} parent=0 // pred_region
    _
  $region13: #{critic_forward.1} parent=0 // pred_fallthru
    _
  // Predicated region
  $region14: #{critic_forward.1} parent=0 // pred_check
    _
  $region15: #{critic_forward.1} parent=0 // pred_check_branch
    %24 = sbr.rel (0) target = $region17
  $region16: #{critic_forward.1} parent=0 // pred_region
    _
  $region17: #{critic_forward.1} parent=0 // pred_fallthru
    _
  // Predicated region
  $region18: #{critic_forward.1} parent=0 // pred_check
    _
  $region19: #{critic_forward.1} parent=0 // pred_check_branch
    %26 = sbr.rel (0) target = $region21
  $region20: #{critic_forward.1} parent=0 // pred_region
    _
  $region21: #{critic_forward.1} parent=0 // pred_fallthru
    _
  // Predicated region
  $region22: #{critic_forward.1} parent=0 // pred_check
    _
  $region23: #{critic_forward.1} parent=0 // pred_check_branch
    %28 = sbr.rel (0) target = $region25
  $region24: #{critic_forward.1} parent=0 // pred_region
    _
  $region25: #{critic_forward.1} parent=0 // pred_fallthru
    _
  // Predicated region
  $region26: #{critic_forward.1} parent=0 // pred_check
    _
  $region27: #{critic_forward.1} parent=0 // pred_check_branch
    %30 = sbr.rel (0) target = $region29
  $region28: #{critic_forward.1} parent=0 // pred_region
    _
  $region29: #{critic_forward.1} parent=0 // pred_fallthru
    _
  // Predicated region
  $region30: #{critic_forward.1} parent=0 // pred_check
    _
  $region31: #{critic_forward.1} parent=0 // pred_check_branch
    %32 = sbr.rel (0) target = $region33
  $region32: #{critic_forward.1} parent=0 // pred_region
    _
  $region33: #{critic_forward.1} parent=0 // pred_fallthru
    _
  // Predicated region
  $region34: #{critic_forward.1} parent=0 // pred_check
    _
  $region35: #{critic_forward.1} parent=0 // pred_check_branch
    %34 = sbr.rel (0) target = $region37
  $region36: #{critic_forward.1} parent=0 // pred_region
    _
  $region37: #{critic_forward.1} parent=0 // pred_fallthru
    _
  // Predicated region
  $region38: #{critic_forward.1} parent=0 // pred_check
    _
  $region39: #{critic_forward.1} parent=0 // pred_check_branch
    %36 = sbr.rel (0) target = $region41
  $region40: #{critic_forward.1} parent=0 // pred_region
    _
  $region41: #{critic_forward.1} parent=0 // pred_fallthru
    _
  // Predicated region
  $region42: #{critic_forward.1} parent=0 // pred_check
    _
  $region43: #{critic_forward.1} parent=0 // pred_check_branch
    %38 = sbr.rel (0) target = $region45
  $region44: #{critic_forward.1} parent=0 // pred_region
    _
  $region45: #{critic_forward.1} parent=0 // pred_fallthru
    _
  %v40 = vld [vmem:[%s0] sm:$0xf]
  %v41 = vld [vmem:[%s1] sm:$0xf]
  %v42 = vld [vmem:[%s1 + $0x4] sm:$0xf]
  %v43 = vld [vmem:[%s1 + $0x8] sm:$0xf]
  %v44 = vld [vmem:[%s1 + $0xc] sm:$0xf]
  %v45 = vld [vmem:[%s1 + $0x10] sm:$0xf]
  %v46 = vld [vmem:[%s1 + $0x14] sm:$0xf]
  %v47 = vld [vmem:[%s1 + $0x18] sm:$0xf]
  %v48 = vld [vmem:[%s1 + $0x1c] sm:$0xf]
  %v49 = vld [vmem:[%s2] sm:$0xff]
  %v50 = vld [vmem:[%s2 + $0x8] sm:$0xff]
  %v51 = vld [vmem:[%s2 + $0x10] sm:$0xff]
  %v52 = vld [vmem:[%s2 + $0x18] sm:$0xff]
  %v53 = vld [vmem:[%s2 + $0x20] sm:$0xff]
  %v54 = vld [vmem:[%s2 + $0x28] sm:$0xff]
  %v55 = vld [vmem:[%s2 + $0x30] sm:$0xff]
  %v56 = vld [vmem:[%s2 + $0x38] sm:$0xff]
  %58 = vset.pattern.permute.xlu0 0
  %59 = vperm.xlu0 %58, %v49
  %v60 = vpop.permute.xlu0 %59
  %63 = vset.pattern.permute.xlu0 0
  %64 = vperm.xlu0 %63, %v50
  %v65 = vpop.permute.xlu0 %64
  %68 = vset.pattern.permute.xlu0 0
  %69 = vperm.xlu0 %68, %v51
  %v70 = vpop.permute.xlu0 %69
  %73 = vset.pattern.permute.xlu0 0
  %74 = vperm.xlu0 %73, %v52
  %v75 = vpop.permute.xlu0 %74
  %78 = vset.pattern.permute.xlu0 0
  %79 = vperm.xlu0 %78, %v53
  %v80 = vpop.permute.xlu0 %79
  %83 = vset.pattern.permute.xlu0 0
  %84 = vperm.xlu0 %83, %v54
  %v85 = vpop.permute.xlu0 %84
  %88 = vset.pattern.permute.xlu0 0
  %89 = vperm.xlu0 %88, %v55
  %v90 = vpop.permute.xlu0 %89
  %93 = vset.pattern.permute.xlu0 0
  %94 = vperm.xlu0 %93, %v56
  %v95 = vpop.permute.xlu0 %94
  %v105 = vunpack.c.l.b16 %v41
  %v106 = vunpack.c.l.b16 %v42
  %v107 = vunpack.c.l.b16 %v43
  %v108 = vunpack.c.l.b16 %v44
  %v109 = vunpack.c.l.b16 %v45
  %v110 = vunpack.c.l.b16 %v46
  %v111 = vunpack.c.l.b16 %v47
  %v112 = vunpack.c.l.b16 %v48
  %v113 = vpack.c.b16 %v106, %v105
  %v114 = vpack.c.b16 %v108, %v107
  %v115 = vpack.c.b16 %v110, %v109
  %v116 = vpack.c.b16 %v112, %v111
  %vm117 = vcmask 64512
  %v119 = vsel %vm117, %v113, 0
  %v122 = vsel %vm117, %v114, 0
  %v125 = vsel %vm117, %v115, 0
  %v128 = vsel %vm117, %v116, 0
  %vm130 = vcmask 1043456
  %v132 = vsel %vm130, %v40, 0
  %134 = vmatprep.subr.bf16.mxu0 0
  %135 = vmatpush1.bf16.msra.mxu0 %v132
  %136 = vmatprep.subr.bf16.mxu0 0
  %137 = vmatpush1.bf16.msra.mxu0 0
  %138 = vmatprep.subr.bf16.mxu0 0
  %139 = vmatpush1.bf16.msra.mxu0 0
  %140 = vmatprep.subr.bf16.mxu0 0
  %141 = vmatpush1.bf16.msra.mxu0 0
  %142 = vmatprep.subr.bf16.mxu0 0
  %143 = vmatpush1.bf16.msra.mxu0 0
  %144 = vmatprep.subr.bf16.mxu0 0
  %145 = vmatpush1.bf16.msra.mxu0 0
  %146 = vmatprep.subr.bf16.mxu0 0
  %147 = vmatpush1.bf16.msra.mxu0 0
  %148 = vmatprep.subr.bf16.mxu0 0
  %149 = vmatpush1.bf16.msra.mxu0 0
  %150 = vmatprep.subr.bf16.mxu0 0
  %151 = vmatpush1.bf16.msra.mxu0 0
  %152 = vmatprep.subr.bf16.mxu0 0
  %153 = vmatpush1.bf16.msra.mxu0 0
  %154 = vmatprep.subr.bf16.mxu0 0
  %155 = vmatpush1.bf16.msra.mxu0 0
  %156 = vmatprep.subr.bf16.mxu0 0
  %157 = vmatpush1.bf16.msra.mxu0 0
  %158 = vmatprep.subr.bf16.mxu0 0
  %159 = vmatpush1.bf16.msra.mxu0 0
  %160 = vmatprep.subr.bf16.mxu0 0
  %161 = vmatpush1.bf16.msra.mxu0 0
  %162 = vmatprep.subr.bf16.mxu0 0
  %163 = vmatpush1.bf16.msra.mxu0 0
  %164 = vmatprep.subr.bf16.mxu0 0
  %165 = vmatpush1.bf16.msra.mxu0 0
  %166 = vmatprep.mubr.bf16.mxu0 0
  %167 = vmatmul.mubr.bf16.gmra.mrb[0].mxu0 %v119
  %v168 = vpop.f32.mrb[0].mxu0
  %v169 = vadd.f32 %v60, %v168
  %v170 = vpop.f32.mrb[0].mxu0
  %v171 = vpop.f32.mrb[0].mxu0
  %v172 = vadd.f32 %v65, %v171
  %v173 = vpop.f32.mrb[0].mxu0
  %174 = vmatprep.mubr.bf16.mxu0 0
  %175 = vmatmul.mubr.bf16.gmra.mrb[0].mxu0 %v122
  %v176 = vpop.f32.mrb[0].mxu0
  %v177 = vadd.f32 %v70, %v176
  %v178 = vpop.f32.mrb[0].mxu0
  %v179 = vpop.f32.mrb[0].mxu0
  %v180 = vadd.f32 %v75, %v179
  %v181 = vpop.f32.mrb[0].mxu0
  %182 = vmatprep.mubr.bf16.mxu0 0
  %183 = vmatmul.mubr.bf16.gmra.mrb[0].mxu0 %v125
  %v184 = vpop.f32.mrb[0].mxu0
  %v185 = vadd.f32 %v80, %v184
  %v186 = vpop.f32.mrb[0].mxu0
  %v187 = vpop.f32.mrb[0].mxu0
  %v188 = vadd.f32 %v85, %v187
  %v189 = vpop.f32.mrb[0].mxu0
  %190 = vmatprep.mubr.bf16.mxu0 0
  %191 = vmatmul.mubr.bf16.gmra.mrb[0].mxu0 %v128
  %v192 = vpop.f32.mrb[0].mxu0
  %v193 = vadd.f32 %v90, %v192
  %v194 = vpop.f32.mrb[0].mxu0
  %v195 = vpop.f32.mrb[0].mxu0
  %v196 = vadd.f32 %v95, %v195
  %v197 = vpop.f32.mrb[0].mxu0
  %198 = vdwg.mxu0
  %v199 = vtanh.pop %v169
  %v200 = vtanh.pop %v172
  %v201 = vtanh.pop %v177
  %v202 = vtanh.pop %v180
  %v203 = vtanh.pop %v185
  %v204 = vtanh.pop %v188
  %v205 = vtanh.pop %v193
  %v206 = vtanh.pop %v196
  %v207 = vpack.c.bf16 %v200, %v199
  %v208 = vpack.c.bf16 %v202, %v201
  %v209 = vpack.c.bf16 %v204, %v203
  %v210 = vpack.c.bf16 %v206, %v205
  %v211 = vld [vmem:[%s3] sm:$0xf]
  %v212 = vld [vmem:[%s3 + $0x4] sm:$0xf]
  %v213 = vld [vmem:[%s3 + $0x8] sm:$0xf]
  %v214 = vld [vmem:[%s3 + $0xc] sm:$0xf]
  %v215 = vld [vmem:[%s3 + $0x10] sm:$0xf]
  %v216 = vld [vmem:[%s3 + $0x14] sm:$0xf]
  %v217 = vld [vmem:[%s3 + $0x18] sm:$0xf]
  %v218 = vld [vmem:[%s3 + $0x1c] sm:$0xf]
  %v219 = vld [vmem:[%s4] sm:$0xff]
  %v220 = vld [vmem:[%s4 + $0x8] sm:$0xff]
  %v221 = vld [vmem:[%s4 + $0x10] sm:$0xff]
  %v222 = vld [vmem:[%s4 + $0x18] sm:$0xff]
  %v223 = vld [vmem:[%s4 + $0x20] sm:$0xff]
  %v224 = vld [vmem:[%s4 + $0x28] sm:$0xff]
  %v225 = vld [vmem:[%s4 + $0x30] sm:$0xff]
  %v226 = vld [vmem:[%s4 + $0x38] sm:$0xff]
  %228 = vset.pattern.permute.xlu0 0
  %229 = vperm.xlu0 %228, %v219
  %v230 = vpop.permute.xlu0 %229
  %233 = vset.pattern.permute.xlu0 0
  %234 = vperm.xlu0 %233, %v220
  %v235 = vpop.permute.xlu0 %234
  %238 = vset.pattern.permute.xlu0 0
  %239 = vperm.xlu0 %238, %v221
  %v240 = vpop.permute.xlu0 %239
  %243 = vset.pattern.permute.xlu0 0
  %244 = vperm.xlu0 %243, %v222
  %v245 = vpop.permute.xlu0 %244
  %248 = vset.pattern.permute.xlu0 0
  %249 = vperm.xlu0 %248, %v223
  %v250 = vpop.permute.xlu0 %249
  %253 = vset.pattern.permute.xlu0 0
  %254 = vperm.xlu0 %253, %v224
  %v255 = vpop.permute.xlu0 %254
  %258 = vset.pattern.permute.xlu0 0
  %259 = vperm.xlu0 %258, %v225
  %v260 = vpop.permute.xlu0 %259
  %263 = vset.pattern.permute.xlu0 0
  %264 = vperm.xlu0 %263, %v226
  %v265 = vpop.permute.xlu0 %264
  %v275 = vunpack.c.l.b16 %v211
  %v276 = vunpack.c.l.b16 %v212
  %v277 = vunpack.c.l.b16 %v213
  %v278 = vunpack.c.l.b16 %v214
  %v279 = vunpack.c.l.b16 %v215
  %v280 = vunpack.c.l.b16 %v216
  %v281 = vunpack.c.l.b16 %v217
  %v282 = vunpack.c.l.b16 %v218
  %v283 = vpack.c.b16 %v276, %v275
  %v284 = vpack.c.b16 %v278, %v277
  %v285 = vpack.c.b16 %v280, %v279
  %v286 = vpack.c.b16 %v282, %v281
  %vm287 = vcmask 523264
  %v289 = vsel %vm287, %v283, 0
  %v292 = vsel %vm287, %v284, 0
  %v295 = vsel %vm287, %v285, 0
  %v298 = vsel %vm287, %v286, 0
  %300 = vmatprep.subr.bf16.mxu0 0
  %301 = vmatpush1.bf16.msra.mxu0 %v207
  %302 = vmatprep.subr.bf16.mxu0 0
  %303 = vmatpush1.bf16.msra.mxu0 %v208
  %304 = vmatprep.subr.bf16.mxu0 0
  %305 = vmatpush1.bf16.msra.mxu0 %v209
  %306 = vmatprep.subr.bf16.mxu0 0
  %307 = vmatpush1.bf16.msra.mxu0 %v210
  %308 = vmatprep.subr.bf16.mxu0 0
  %309 = vmatpush1.bf16.msra.mxu0 0
  %310 = vmatprep.subr.bf16.mxu0 0
  %311 = vmatpush1.bf16.msra.mxu0 0
  %312 = vmatprep.subr.bf16.mxu0 0
  %313 = vmatpush1.bf16.msra.mxu0 0
  %314 = vmatprep.subr.bf16.mxu0 0
  %315 = vmatpush1.bf16.msra.mxu0 0
  %316 = vmatprep.subr.bf16.mxu0 0
  %317 = vmatpush1.bf16.msra.mxu0 0
  %318 = vmatprep.subr.bf16.mxu0 0
  %319 = vmatpush1.bf16.msra.mxu0 0
  %320 = vmatprep.subr.bf16.mxu0 0
  %321 = vmatpush1.bf16.msra.mxu0 0
  %322 = vmatprep.subr.bf16.mxu0 0
  %323 = vmatpush1.bf16.msra.mxu0 0
  %324 = vmatprep.subr.bf16.mxu0 0
  %325 = vmatpush1.bf16.msra.mxu0 0
  %326 = vmatprep.subr.bf16.mxu0 0
  %327 = vmatpush1.bf16.msra.mxu0 0
  %328 = vmatprep.subr.bf16.mxu0 0
  %329 = vmatpush1.bf16.msra.mxu0 0
  %330 = vmatprep.subr.bf16.mxu0 0
  %331 = vmatpush1.bf16.msra.mxu0 0
  %332 = vmatprep.mubr.bf16.mxu0 0
  %333 = vmatmul.mubr.bf16.gmra.mrb[0].mxu0 %v289
  %v334 = vpop.f32.mrb[0].mxu0
  %v335 = vadd.f32 %v230, %v334
  %v336 = vpop.f32.mrb[0].mxu0
  %v337 = vpop.f32.mrb[0].mxu0
  %v338 = vadd.f32 %v235, %v337
  %v339 = vpop.f32.mrb[0].mxu0
  %340 = vmatprep.mubr.bf16.mxu0 0
  %341 = vmatmul.mubr.bf16.gmra.mrb[0].mxu0 %v292
  %v342 = vpop.f32.mrb[0].mxu0
  %v343 = vadd.f32 %v240, %v342
  %v344 = vpop.f32.mrb[0].mxu0
  %v345 = vpop.f32.mrb[0].mxu0
  %v346 = vadd.f32 %v245, %v345
  %v347 = vpop.f32.mrb[0].mxu0
  %348 = vmatprep.mubr.bf16.mxu0 0
  %349 = vmatmul.mubr.bf16.gmra.mrb[0].mxu0 %v295
  %v350 = vpop.f32.mrb[0].mxu0
  %v351 = vadd.f32 %v250, %v350
  %v352 = vpop.f32.mrb[0].mxu0
  %v353 = vpop.f32.mrb[0].mxu0
  %v354 = vadd.f32 %v255, %v353
  %v355 = vpop.f32.mrb[0].mxu0
  %356 = vmatprep.mubr.bf16.mxu0 0
  %357 = vmatmul.mubr.bf16.gmra.mrb[0].mxu0 %v298
  %v358 = vpop.f32.mrb[0].mxu0
  %v359 = vadd.f32 %v260, %v358
  %v360 = vpop.f32.mrb[0].mxu0
  %v361 = vpop.f32.mrb[0].mxu0
  %v362 = vadd.f32 %v265, %v361
  %v363 = vpop.f32.mrb[0].mxu0
  %364 = vdwg.mxu0
  %v365 = vtanh.pop %v335
  %v366 = vtanh.pop %v338
  %v367 = vtanh.pop %v343
  %v368 = vtanh.pop %v346
  %v369 = vtanh.pop %v351
  %v370 = vtanh.pop %v354
  %v371 = vtanh.pop %v359
  %v372 = vtanh.pop %v362
  %v373 = vpack.c.bf16 %v366, %v365
  %v374 = vpack.c.bf16 %v368, %v367
  %v375 = vpack.c.bf16 %v370, %v369
  %v376 = vpack.c.bf16 %v372, %v371
  %v377 = vld [vmem:[%s5] sm:$0xf]
  %v378 = vld [vmem:[%s5 + $0x4] sm:$0xf]
  %v379 = vld [vmem:[%s5 + $0x8] sm:$0xf]
  %v380 = vld [vmem:[%s5 + $0xc] sm:$0xf]
  %v381 = vld [vmem:[%s5 + $0x10] sm:$0xf]
  %v382 = vld [vmem:[%s5 + $0x14] sm:$0xf]
  %v383 = vld [vmem:[%s5 + $0x18] sm:$0xf]
  %v384 = vld [vmem:[%s5 + $0x1c] sm:$0xf]
  %v385 = vld [vmem:[%s6] sm:$0xff]
  %v386 = vld [vmem:[%s6 + $0x8] sm:$0xff]
  %v387 = vld [vmem:[%s6 + $0x10] sm:$0xff]
  %v388 = vld [vmem:[%s6 + $0x18] sm:$0xff]
  %v389 = vld [vmem:[%s6 + $0x20] sm:$0xff]
  %v390 = vld [vmem:[%s6 + $0x28] sm:$0xff]
  %v391 = vld [vmem:[%s6 + $0x30] sm:$0xff]
  %v392 = vld [vmem:[%s6 + $0x38] sm:$0xff]
  %394 = vset.pattern.permute.xlu0 0
  %395 = vperm.xlu0 %394, %v385
  %v396 = vpop.permute.xlu0 %395
  %399 = vset.pattern.permute.xlu0 0
  %400 = vperm.xlu0 %399, %v386
  %v401 = vpop.permute.xlu0 %400
  %404 = vset.pattern.permute.xlu0 0
  %405 = vperm.xlu0 %404, %v387
  %v406 = vpop.permute.xlu0 %405
  %409 = vset.pattern.permute.xlu0 0
  %410 = vperm.xlu0 %409, %v388
  %v411 = vpop.permute.xlu0 %410
  %414 = vset.pattern.permute.xlu0 0
  %415 = vperm.xlu0 %414, %v389
  %v416 = vpop.permute.xlu0 %415
  %419 = vset.pattern.permute.xlu0 0
  %420 = vperm.xlu0 %419, %v390
  %v421 = vpop.permute.xlu0 %420
  %424 = vset.pattern.permute.xlu0 0
  %425 = vperm.xlu0 %424, %v391
  %v426 = vpop.permute.xlu0 %425
  %429 = vset.pattern.permute.xlu0 0
  %430 = vperm.xlu0 %429, %v392
  %v431 = vpop.permute.xlu0 %430
  %v441 = vunpack.c.l.b16 %v377
  %v442 = vunpack.c.l.b16 %v378
  %v443 = vunpack.c.l.b16 %v379
  %v444 = vunpack.c.l.b16 %v380
  %v445 = vunpack.c.l.b16 %v381
  %v446 = vunpack.c.l.b16 %v382
  %v447 = vunpack.c.l.b16 %v383
  %v448 = vunpack.c.l.b16 %v384
  %v449 = vpack.c.b16 %v442, %v441
  %v450 = vpack.c.b16 %v444, %v443
  %v451 = vpack.c.b16 %v446, %v445
  %v452 = vpack.c.b16 %v448, %v447
  %v454 = vsel %vm287, %v449, 0
  %v457 = vsel %vm287, %v450, 0
  %v460 = vsel %vm287, %v451, 0
  %v463 = vsel %vm287, %v452, 0
  %465 = vmatprep.subr.bf16.mxu0 0
  %466 = vmatpush1.bf16.msra.mxu0 %v373
  %467 = vmatprep.subr.bf16.mxu0 0
  %468 = vmatpush1.bf16.msra.mxu0 %v374
  %469 = vmatprep.subr.bf16.mxu0 0
  %470 = vmatpush1.bf16.msra.mxu0 %v375
  %471 = vmatprep.subr.bf16.mxu0 0
  %472 = vmatpush1.bf16.msra.mxu0 %v376
  %473 = vmatprep.subr.bf16.mxu0 0
  %474 = vmatpush1.bf16.msra.mxu0 0
  %475 = vmatprep.subr.bf16.mxu0 0
  %476 = vmatpush1.bf16.msra.mxu0 0
  %477 = vmatprep.subr.bf16.mxu0 0
  %478 = vmatpush1.bf16.msra.mxu0 0
  %479 = vmatprep.subr.bf16.mxu0 0
  %480 = vmatpush1.bf16.msra.mxu0 0
  %481 = vmatprep.subr.bf16.mxu0 0
  %482 = vmatpush1.bf16.msra.mxu0 0
  %483 = vmatprep.subr.bf16.mxu0 0
  %484 = vmatpush1.bf16.msra.mxu0 0
  %485 = vmatprep.subr.bf16.mxu0 0
  %486 = vmatpush1.bf16.msra.mxu0 0
  %487 = vmatprep.subr.bf16.mxu0 0
  %488 = vmatpush1.bf16.msra.mxu0 0
  %489 = vmatprep.subr.bf16.mxu0 0
  %490 = vmatpush1.bf16.msra.mxu0 0
  %491 = vmatprep.subr.bf16.mxu0 0
  %492 = vmatpush1.bf16.msra.mxu0 0
  %493 = vmatprep.subr.bf16.mxu0 0
  %494 = vmatpush1.bf16.msra.mxu0 0
  %495 = vmatprep.subr.bf16.mxu0 0
  %496 = vmatpush1.bf16.msra.mxu0 0
  %497 = vmatprep.mubr.bf16.mxu0 0
  %498 = vmatmul.mubr.bf16.gmra.mrb[0].mxu0 %v454
  %v499 = vpop.f32.mrb[0].mxu0
  %v500 = vadd.f32 %v396, %v499
  %v501 = vpop.f32.mrb[0].mxu0
  %v502 = vpop.f32.mrb[0].mxu0
  %v503 = vadd.f32 %v401, %v502
  %v504 = vpop.f32.mrb[0].mxu0
  %505 = vmatprep.mubr.bf16.mxu0 0
  %506 = vmatmul.mubr.bf16.gmra.mrb[0].mxu0 %v457
  %v507 = vpop.f32.mrb[0].mxu0
  %v508 = vadd.f32 %v406, %v507
  %v509 = vpop.f32.mrb[0].mxu0
  %v510 = vpop.f32.mrb[0].mxu0
  %v511 = vadd.f32 %v411, %v510
  %v512 = vpop.f32.mrb[0].mxu0
  %513 = vmatprep.mubr.bf16.mxu0 0
  %514 = vmatmul.mubr.bf16.gmra.mrb[0].mxu0 %v460
  %v515 = vpop.f32.mrb[0].mxu0
  %v516 = vadd.f32 %v416, %v515
  %v517 = vpop.f32.mrb[0].mxu0
  %v518 = vpop.f32.mrb[0].mxu0
  %v519 = vadd.f32 %v421, %v518
  %v520 = vpop.f32.mrb[0].mxu0
  %521 = vmatprep.mubr.bf16.mxu0 0
  %522 = vmatmul.mubr.bf16.gmra.mrb[0].mxu0 %v463
  %v523 = vpop.f32.mrb[0].mxu0
  %v524 = vadd.f32 %v426, %v523
  %v525 = vpop.f32.mrb[0].mxu0
  %v526 = vpop.f32.mrb[0].mxu0
  %v527 = vadd.f32 %v431, %v526
  %v528 = vpop.f32.mrb[0].mxu0
  %529 = vdwg.mxu0
  %v530 = vtanh.pop %v500
  %v531 = vtanh.pop %v503
  %v532 = vtanh.pop %v508
  %v533 = vtanh.pop %v511
  %v534 = vtanh.pop %v516
  %v535 = vtanh.pop %v519
  %v536 = vtanh.pop %v524
  %v537 = vtanh.pop %v527
  %v538 = vpack.c.bf16 %v531, %v530
  %v539 = vpack.c.bf16 %v533, %v532
  %v540 = vpack.c.bf16 %v535, %v534
  %v541 = vpack.c.bf16 %v537, %v536
  %v542 = vld [vmem:[%s7] sm:$0xf]
  %v543 = vld [vmem:[%s7 + $0x4] sm:$0xf]
  %v544 = vld [vmem:[%s7 + $0x8] sm:$0xf]
  %v545 = vld [vmem:[%s7 + $0xc] sm:$0xf]
  %v546 = vld [vmem:[%s7 + $0x10] sm:$0xf]
  %v547 = vld [vmem:[%s7 + $0x14] sm:$0xf]
  %v548 = vld [vmem:[%s7 + $0x18] sm:$0xf]
  %v549 = vld [vmem:[%s7 + $0x1c] sm:$0xf]
  %v550 = vld [vmem:[%s8] sm:$0xff]
  %v551 = vld [vmem:[%s8 + $0x8] sm:$0xff]
  %v552 = vld [vmem:[%s8 + $0x10] sm:$0xff]
  %v553 = vld [vmem:[%s8 + $0x18] sm:$0xff]
  %v554 = vld [vmem:[%s8 + $0x20] sm:$0xff]
  %v555 = vld [vmem:[%s8 + $0x28] sm:$0xff]
  %v556 = vld [vmem:[%s8 + $0x30] sm:$0xff]
  %v557 = vld [vmem:[%s8 + $0x38] sm:$0xff]
  %559 = vset.pattern.permute.xlu0 0
  %560 = vperm.xlu0 %559, %v550
  %v561 = vpop.permute.xlu0 %560
  %564 = vset.pattern.permute.xlu0 0
  %565 = vperm.xlu0 %564, %v551
  %v566 = vpop.permute.xlu0 %565
  %569 = vset.pattern.permute.xlu0 0
  %570 = vperm.xlu0 %569, %v552
  %v571 = vpop.permute.xlu0 %570
  %574 = vset.pattern.permute.xlu0 0
  %575 = vperm.xlu0 %574, %v553
  %v576 = vpop.permute.xlu0 %575
  %579 = vset.pattern.permute.xlu0 0
  %580 = vperm.xlu0 %579, %v554
  %v581 = vpop.permute.xlu0 %580
  %584 = vset.pattern.permute.xlu0 0
  %585 = vperm.xlu0 %584, %v555
  %v586 = vpop.permute.xlu0 %585
  %589 = vset.pattern.permute.xlu0 0
  %590 = vperm.xlu0 %589, %v556
  %v591 = vpop.permute.xlu0 %590
  %594 = vset.pattern.permute.xlu0 0
  %595 = vperm.xlu0 %594, %v557
  %v596 = vpop.permute.xlu0 %595
  %v606 = vunpack.c.l.b16 %v542
  %v607 = vunpack.c.l.b16 %v543
  %v608 = vunpack.c.l.b16 %v544
  %v609 = vunpack.c.l.b16 %v545
  %v610 = vunpack.c.l.b16 %v546
  %v611 = vunpack.c.l.b16 %v547
  %v612 = vunpack.c.l.b16 %v548
  %v613 = vunpack.c.l.b16 %v549
  %v614 = vpack.c.b16 %v607, %v606
  %v615 = vpack.c.b16 %v609, %v608
  %v616 = vpack.c.b16 %v611, %v610
  %v617 = vpack.c.b16 %v613, %v612
  %v619 = vsel %vm287, %v614, 0
  %v622 = vsel %vm287, %v615, 0
  %v625 = vsel %vm287, %v616, 0
  %v628 = vsel %vm287, %v617, 0
  %630 = vmatprep.subr.bf16.mxu0 0
  %631 = vmatpush1.bf16.msra.mxu0 %v538
  %632 = vmatprep.subr.bf16.mxu0 0
  %633 = vmatpush1.bf16.msra.mxu0 %v539
  %634 = vmatprep.subr.bf16.mxu0 0
  %635 = vmatpush1.bf16.msra.mxu0 %v540
  %636 = vmatprep.subr.bf16.mxu0 0
  %637 = vmatpush1.bf16.msra.mxu0 %v541
  %638 = vmatprep.subr.bf16.mxu0 0
  %639 = vmatpush1.bf16.msra.mxu0 0
  %640 = vmatprep.subr.bf16.mxu0 0
  %641 = vmatpush1.bf16.msra.mxu0 0
  %642 = vmatprep.subr.bf16.mxu0 0
  %643 = vmatpush1.bf16.msra.mxu0 0
  %644 = vmatprep.subr.bf16.mxu0 0
  %645 = vmatpush1.bf16.msra.mxu0 0
  %646 = vmatprep.subr.bf16.mxu0 0
  %647 = vmatpush1.bf16.msra.mxu0 0
  %648 = vmatprep.subr.bf16.mxu0 0
  %649 = vmatpush1.bf16.msra.mxu0 0
  %650 = vmatprep.subr.bf16.mxu0 0
  %651 = vmatpush1.bf16.msra.mxu0 0
  %652 = vmatprep.subr.bf16.mxu0 0
  %653 = vmatpush1.bf16.msra.mxu0 0
  %654 = vmatprep.subr.bf16.mxu0 0
  %655 = vmatpush1.bf16.msra.mxu0 0
  %656 = vmatprep.subr.bf16.mxu0 0
  %657 = vmatpush1.bf16.msra.mxu0 0
  %658 = vmatprep.subr.bf16.mxu0 0
  %659 = vmatpush1.bf16.msra.mxu0 0
  %660 = vmatprep.subr.bf16.mxu0 0
  %661 = vmatpush1.bf16.msra.mxu0 0
  %662 = vmatprep.mubr.bf16.mxu0 0
  %663 = vmatmul.mubr.bf16.gmra.mrb[0].mxu0 %v619
  %v664 = vpop.f32.mrb[0].mxu0
  %v665 = vadd.f32 %v561, %v664
  %v666 = vpop.f32.mrb[0].mxu0
  %v667 = vpop.f32.mrb[0].mxu0
  %v668 = vadd.f32 %v566, %v667
  %v669 = vpop.f32.mrb[0].mxu0
  %670 = vmatprep.mubr.bf16.mxu0 0
  %671 = vmatmul.mubr.bf16.gmra.mrb[0].mxu0 %v622
  %v672 = vpop.f32.mrb[0].mxu0
  %v673 = vadd.f32 %v571, %v672
  %v674 = vpop.f32.mrb[0].mxu0
  %v675 = vpop.f32.mrb[0].mxu0
  %v676 = vadd.f32 %v576, %v675
  %v677 = vpop.f32.mrb[0].mxu0
  %678 = vmatprep.mubr.bf16.mxu0 0
  %679 = vmatmul.mubr.bf16.gmra.mrb[0].mxu0 %v625
  %v680 = vpop.f32.mrb[0].mxu0
  %v681 = vadd.f32 %v581, %v680
  %v682 = vpop.f32.mrb[0].mxu0
  %v683 = vpop.f32.mrb[0].mxu0
  %v684 = vadd.f32 %v586, %v683
  %v685 = vpop.f32.mrb[0].mxu0
  %686 = vmatprep.mubr.bf16.mxu0 0
  %687 = vmatmul.mubr.bf16.gmra.mrb[0].mxu0 %v628
  %v688 = vpop.f32.mrb[0].mxu0
  %v689 = vadd.f32 %v591, %v688
  %v690 = vpop.f32.mrb[0].mxu0
  %v691 = vpop.f32.mrb[0].mxu0
  %v692 = vadd.f32 %v596, %v691
  %v693 = vpop.f32.mrb[0].mxu0
  %694 = vdwg.mxu0
  %v695 = vtanh.pop %v665
  %v696 = vtanh.pop %v668
  %v697 = vtanh.pop %v673
  %v698 = vtanh.pop %v676
  %v699 = vtanh.pop %v681
  %v700 = vtanh.pop %v684
  %v701 = vtanh.pop %v689
  %v702 = vtanh.pop %v692
  %v703 = vpack.c.bf16 %v696, %v695
  %v704 = vpack.c.bf16 %v698, %v697
  %v705 = vpack.c.bf16 %v700, %v699
  %v706 = vpack.c.bf16 %v702, %v701
  %v707 = vld [vmem:[%s9] sm:$0x1]
  %s708 = sld [smem:[#allocation2]]
  %v709 = vstv %s708
  %v711 = vsel %vm287, %v707, 0
  %713 = vmatprep.subr.bf16.mxu0 0
  %714 = vmatpush1.bf16.msra.mxu0 %v703
  %715 = vmatprep.subr.bf16.mxu0 0
  %716 = vmatpush1.bf16.msra.mxu0 %v704
  %717 = vmatprep.subr.bf16.mxu0 0
  %718 = vmatpush1.bf16.msra.mxu0 %v705
  %719 = vmatprep.subr.bf16.mxu0 0
  %720 = vmatpush1.bf16.msra.mxu0 %v706
  %721 = vmatprep.subr.bf16.mxu0 0
  %722 = vmatpush1.bf16.msra.mxu0 0
  %723 = vmatprep.subr.bf16.mxu0 0
  %724 = vmatpush1.bf16.msra.mxu0 0
  %725 = vmatprep.subr.bf16.mxu0 0
  %726 = vmatpush1.bf16.msra.mxu0 0
  %727 = vmatprep.subr.bf16.mxu0 0
  %728 = vmatpush1.bf16.msra.mxu0 0
  %729 = vmatprep.subr.bf16.mxu0 0
  %730 = vmatpush1.bf16.msra.mxu0 0
  %731 = vmatprep.subr.bf16.mxu0 0
  %732 = vmatpush1.bf16.msra.mxu0 0
  %733 = vmatprep.subr.bf16.mxu0 0
  %734 = vmatpush1.bf16.msra.mxu0 0
  %735 = vmatprep.subr.bf16.mxu0 0
  %736 = vmatpush1.bf16.msra.mxu0 0
  %737 = vmatprep.subr.bf16.mxu0 0
  %738 = vmatpush1.bf16.msra.mxu0 0
  %739 = vmatprep.subr.bf16.mxu0 0
  %740 = vmatpush1.bf16.msra.mxu0 0
  %741 = vmatprep.subr.bf16.mxu0 0
  %742 = vmatpush1.bf16.msra.mxu0 0
  %743 = vmatprep.subr.bf16.mxu0 0
  %744 = vmatpush1.bf16.msra.mxu0 0
  %745 = vmatprep.mubr.bf16.mxu0 0
  %746 = vmatmul.mubr.bf16.gmra.mrb[0].mxu0 %v711
  %v747 = vpop.f32.mrb[0].mxu0
  %v748 = vadd.f32 %v709, %v747
  %v749 = vpop.f32.mrb[0].mxu0
  %v750 = vpop.f32.mrb[0].mxu0
  %v751 = vpop.f32.mrb[0].mxu0
  %752 = vdwg.mxu0
  %753 = vst [vmem:[%s11] sm:$0x1] %v748
  // Predicated region
  $region46: #{critic_forward.1} parent=0 // pred_check
    _
  $region47: #{critic_forward.1} parent=0 // pred_check_branch
    %755 = sbr.rel (0) target = $region49
  $region48: #{critic_forward.1} parent=0 // pred_region
    _
  $region49: #{critic_forward.1} parent=0 // pred_fallthru
    _
  // Predicated region
  $region50: #{critic_forward.1} parent=0 // pred_check
    _
  $region51: #{critic_forward.1} parent=0 // pred_check_branch
    %757 = sbr.rel (0) target = $region53
  $region52: #{critic_forward.1} parent=0 // pred_region
    _
  $region53: #{critic_forward.1} parent=0 // pred_fallthru
    _

</llo_original>
